<compile_context>
chip_gen: v6e
topology: v6e:2x2x1
jax: 0.10.0
libtpu: 0.0.40
codegen_flags: <defaults>
</compile_context>

<pallas_src>
import functools

import jax
import jax.numpy as jnp
from jax.experimental import pallas as pl
from jax.experimental.pallas import tpu as pltpu


def _round_up(x, m):
    return ((x + m - 1) // m) * m


def _pca_score_kernel(w_ref, emb_ref, out_ref):
    # w_ref:   (num_classes, embed_dim)  full weight (tiny), resident every step
    # emb_ref: (embed_dim, tile_n)       VMEM tile of embeds1 (nodes on lanes)
    # out_ref: (num_classes, tile_n)     lane-dense output tile
    out_ref[...] = jnp.dot(
        w_ref[...], emb_ref[...], preferred_element_type=jnp.float32
    ).astype(out_ref.dtype)


@functools.partial(jax.jit, static_argnames=("tile_n",))
def pca_layer_forward(embeds1, label_scores, weight, *, tile_n=8192):
    """Pallas implementation of PCALayer.forward's own compute.

    embeds1:      (embed_dim, num_nodes) float32   (inter1 output, column embeddings)
    label_scores: (num_nodes, num_classes) float32 (passthrough from inter1)
    weight:       (num_classes, embed_dim) float32
    returns (gnn_scores, label_scores) with gnn_scores = (weight @ embeds1).T,
    shape (num_nodes, num_classes).
    """
    embed_dim, num_nodes = embeds1.shape
    num_classes = weight.shape[0]

    # Lane-dense tiling along the node axis. Small problems -> single tile
    # (no pipeline overhead); otherwise large tiles to amortize per-step cost.
    tile = min(tile_n, _round_up(num_nodes, 128))
    padded = _round_up(num_nodes, tile)
    if padded != num_nodes:
        embeds1 = jnp.pad(embeds1, ((0, 0), (0, padded - num_nodes)))

    grid = (padded // tile,)

    # VMEM budget: double-buffered input tile + double-buffered (sublane-padded)
    # output tile + weight. Only raise the scoped limit if actually needed; cap
    # well under v7x's 64 MiB physical VMEM.
    bytes_needed = (
        2 * embed_dim * tile * 4          # embeds1 tiles (double-buffered)
        + 2 * _round_up(num_classes, 8) * tile * 4   # output tiles (sublane-padded)
        + 2 * _round_up(num_classes, 8) * _round_up(embed_dim, 128) * 4  # weight
    )
    vmem_limit = None
    if bytes_needed > (12 << 20):
        vmem_limit = min(2 * bytes_needed, 48 << 20)

    scores_cn = pl.pallas_call(
        _pca_score_kernel,
        out_shape=jax.ShapeDtypeStruct((num_classes, padded), jnp.float32),
        grid_spec=pltpu.PrefetchScalarGridSpec(
            num_scalar_prefetch=0,
            grid=grid,
            in_specs=[
                # weight is tiny; keep the full array resident every step
                pl.BlockSpec((num_classes, embed_dim), lambda i: (0, 0)),
                # tile embeds1 along the node (lane) axis
                pl.BlockSpec((embed_dim, tile), lambda i: (0, i)),
            ],
            # lane-dense output: node axis on lanes, classes on sublanes
            out_specs=pl.BlockSpec((num_classes, tile), lambda i: (0, i)),
        ),
        compiler_params=pltpu.CompilerParams(
            dimension_semantics=("parallel",),
            vmem_limit_bytes=vmem_limit,
        ),
    )(weight, embeds1)

    # Tiny (num_classes, num_nodes) -> (num_nodes, num_classes) transpose in the
    # wrapper; drop any node padding.
    gnn_scores = scores_cn[:, :num_nodes].T
    return gnn_scores, label_scores


def xavier_uniform(key, shape, dtype=jnp.float32):
    fan_out, fan_in = shape
    limit = (6.0 / (fan_in + fan_out)) ** 0.5
    return jax.random.uniform(key, shape, dtype, minval=-limit, maxval=limit)


if __name__ == "__main__":
    num_classes = 2
    embed_dim = 32      # inter1.embed_dim
    num_nodes = 200     # deliberately NOT a multiple of 128 to exercise padding

    key = jax.random.PRNGKey(0)
    k_w, k_e, k_l = jax.random.split(key, 3)

    # PCALayer parameter: weight (num_classes, embed_dim), xavier_uniform init
    weight = xavier_uniform(k_w, (num_classes, embed_dim))

    # Synthetic inter1 outputs (see TODO(synk) above)
    embeds1 = jax.random.normal(k_e, (embed_dim, num_nodes), jnp.float32)
    label_scores = jax.random.normal(k_l, (num_nodes, num_classes), jnp.float32)

    gnn_scores, label_out = pca_layer_forward(embeds1, label_scores, weight)
    jax.block_until_ready((gnn_scores, label_out))

    # Correctness check vs plain JAX reference of torch semantics:
    # scores = weight.mm(embeds1); return scores.t()
    ref = (weight @ embeds1).T
    assert gnn_scores.shape == (num_nodes, num_classes)
    assert jnp.allclose(gnn_scores, ref, atol=1e-5, rtol=1e-5)
    assert jnp.array_equal(label_out, label_scores)

    print("KERNEL_OK")
</pallas_src>

<mosaic_0001>
module attributes {stable_mosaic.version = 11 : i64} {
  func.func @_pca_score_kernel(%arg0: i32, %arg1: memref<2x32xf32, #tpu.memory_space<vmem>>, %arg2: memref<32x256xf32, #tpu.memory_space<vmem>>, %arg3: memref<2x256xf32, #tpu.memory_space<vmem>>) attributes {dimension_semantics = [#tpu.dimension_semantics<parallel>], iteration_bounds = array<i64: 1>, scalar_prefetch = 0 : i64, scratch_operands = 0 : i64, tpu.core_type = #tpu.core_type<tc>, window_params = [{pipeline_mode = #tpu.pipeline_mode<synchronous>, transform_indices = @transform_0, window_bounds = array<i64: 2, 32>}, {transform_indices = @transform_1, window_bounds = array<i64: 32, 256>}, {transform_indices = @transform_2, window_bounds = array<i64: 2, 256>}]} {
    %c0 = arith.constant 0 : index
    %c0_0 = arith.constant 0 : index
    %0 = vector.load %arg1[%c0, %c0_0] : memref<2x32xf32, #tpu.memory_space<vmem>>, vector<2x32xf32>
    %c0_1 = arith.constant 0 : index
    %c0_2 = arith.constant 0 : index
    %1 = vector.load %arg2[%c0_1, %c0_2] : memref<32x256xf32, #tpu.memory_space<vmem>>, vector<32x256xf32>
    %cst = arith.constant dense<0.000000e+00> : vector<2x256xf32>
    %2 = tpu.matmul %0, %1, %cst {dimension_numbers = #tpu.dot_dimension_numbers<[1], [0], [0], [1], [0, 0, 1, 1], [], []>} : vector<2x32xf32>, vector<32x256xf32>, vector<2x256xf32> -> vector<2x256xf32>
    %c0_3 = arith.constant 0 : index
    %c0_4 = arith.constant 0 : index
    %3 = vector.load %arg3[%c0_3, %c0_4] : memref<2x256xf32, #tpu.memory_space<vmem>>, vector<2x256xf32>
    tpu.vector_store %arg3[%c0_3, %c0_4], %2 {strides = array<i32>} : memref<2x256xf32, #tpu.memory_space<vmem>>, vector<2x256xf32>,
    return
  }
  func.func @transform_0(%arg0: i32) -> (i32, i32) {
    %c0_i32 = arith.constant 0 : i32
    %c0_i32_0 = arith.constant 0 : i32
    %c0_i32_1 = arith.constant 0 : i32
    return %c0_i32, %c0_i32_0 : i32, i32
  }
  func.func @transform_1(%arg0: i32) -> (i32, i32) {
    %c0_i32 = arith.constant 0 : i32
    %c0_i32_0 = arith.constant 0 : i32
    return %c0_i32, %arg0 : i32, i32
  }
  func.func @transform_2(%arg0: i32) -> (i32, i32) {
    %c0_i32 = arith.constant 0 : i32
    %c0_i32_0 = arith.constant 0 : i32
    return %c0_i32, %arg0 : i32, i32
  }
}

</mosaic_0001>

<llo_original>
// kernel: pca_layer_forward.1
$region0: #{pca_layer_forward.1}
  #allocation0 [shape = 'u32[]', space=smem, size = 0x4, offset = 0x4, fixed_abs, tag = 'smem constant byte address 0x4 - core index']
  #allocation1 [shape = 'u32[144,128]{1,0:T(1,128)}', space=vmem, size = 0x12000, scoped, tag = 'internal scratch']
  %s0 = inlined_call_operand.vmem [shape: f32[2,32], index: 0, kind: input, shape index: {}]
  %s1 = inlined_call_operand.vmem [shape: f32[32,256], index: 1, kind: input, shape index: {}]
  %s2 = inlined_call_operand.vmem [shape: f32[2,256], index: 2, kind: output, shape index: {}]
  %s3 = sld [smem:[#allocation0]]
  $region18: #{pca_layer_forward.1} parent=0
    _
  %s5 = ssub.s32 1, %s3
  %s6 = scalar_select 0, %s5, %s3
  // Predicated region
  $region2: #{pca_layer_forward.1} parent=0 // pred_check
    _
  $region3: #{pca_layer_forward.1} parent=0 // pred_check_branch
    %8 = sbr.rel (0) target = $region5
  $region4: #{pca_layer_forward.1} parent=0 // pred_region
    _
  $region5: #{pca_layer_forward.1} parent=0 // pred_fallthru
    _
  // Predicated region
  $region6: #{pca_layer_forward.1} parent=0 // pred_check
    _
  $region7: #{pca_layer_forward.1} parent=0 // pred_check_branch
    %10 = sbr.rel (0) target = $region9
  $region8: #{pca_layer_forward.1} parent=0 // pred_region
    _
  $region9: #{pca_layer_forward.1} parent=0 // pred_fallthru
    _
  %v11 = vld [vmem:[%s0] sm:$0x3]
  %v12 = vld [vmem:[%s1] sm:$0xff]
  %v13 = vld [vmem:[%s1 + $0x8] sm:$0xff]
  %v14 = vld [vmem:[%s1 + $0x10] sm:$0xff]
  %v15 = vld [vmem:[%s1 + $0x18] sm:$0xff]
  %v16 = vld [vmem:[%s1 + $0x20] sm:$0xff]
  %v17 = vld [vmem:[%s1 + $0x28] sm:$0xff]
  %v18 = vld [vmem:[%s1 + $0x30] sm:$0xff]
  %v19 = vld [vmem:[%s1 + $0x38] sm:$0xff]
  %vm20 = vcmask 261120
  %v22 = vsel %vm20, %v11, 0
  %24 = vmatprep.subr.mxu0 0.0
  %25 = vmatpush1.msra.mxu0 0.0
  %26 = vmatprep.subr.mxu0 0.0
  %27 = vmatpush1.msra.mxu0 0.0
  %28 = vmatprep.subr.mxu0 0.0
  %29 = vmatpush1.msra.mxu0 0.0
  %30 = vmatprep.subr.mxu0 0.0
  %31 = vmatpush1.msra.mxu0 0.0
  %32 = vmatprep.subr.mxu0 0.0
  %33 = vmatpush1.msra.mxu0 0.0
  %34 = vmatprep.subr.mxu0 0.0
  %35 = vmatpush1.msra.mxu0 0.0
  %36 = vmatprep.subr.mxu0 0.0
  %37 = vmatpush1.msra.mxu0 0.0
  %38 = vmatprep.subr.mxu0 0.0
  %39 = vmatpush1.msra.mxu0 0.0
  %40 = vmatprep.subr.mxu0 0.0
  %41 = vmatpush1.msra.mxu0 0.0
  %42 = vmatprep.subr.mxu0 0.0
  %43 = vmatpush1.msra.mxu0 0.0
  %44 = vmatprep.subr.mxu0 0.0
  %45 = vmatpush1.msra.mxu0 0.0
  %46 = vmatprep.subr.mxu0 0.0
  %47 = vmatpush1.msra.mxu0 0.0
  %48 = vmatprep.subr.mxu0 %v19
  %49 = vmatpush1.msra.mxu0 %v18
  %50 = vmatprep.subr.mxu0 %v17
  %51 = vmatpush1.msra.mxu0 %v16
  %52 = vmatprep.subr.mxu0 %v15
  %53 = vmatpush1.msra.mxu0 %v14
  %54 = vmatprep.subr.mxu0 %v13
  %55 = vmatpush1.msra.mxu0 %v12
  %56 = vmatprep.subr.mxu0 0.0
  %57 = vmatpush2.msra.mxu0 0.0
  %58 = vmatprep.subr.mxu0 0.0
  %59 = vmatpush2.msra.mxu0 0.0
  %60 = vmatprep.subr.mxu0 0.0
  %61 = vmatpush2.msra.mxu0 0.0
  %62 = vmatprep.subr.mxu0 0.0
  %63 = vmatpush2.msra.mxu0 0.0
  %64 = vmatprep.subr.mxu0 0.0
  %65 = vmatpush2.msra.mxu0 0.0
  %66 = vmatprep.subr.mxu0 0.0
  %67 = vmatpush2.msra.mxu0 0.0
  %68 = vmatprep.subr.mxu0 0.0
  %69 = vmatpush2.msra.mxu0 0.0
  %70 = vmatprep.subr.mxu0 0.0
  %71 = vmatpush2.msra.mxu0 0.0
  %72 = vmatprep.subr.mxu0 0.0
  %73 = vmatpush2.msra.mxu0 0.0
  %74 = vmatprep.subr.mxu0 0.0
  %75 = vmatpush2.msra.mxu0 0.0
  %76 = vmatprep.subr.mxu0 0.0
  %77 = vmatpush2.msra.mxu0 0.0
  %78 = vmatprep.subr.mxu0 0.0
  %79 = vmatpush2.msra.mxu0 0.0
  %80 = vmatprep.subr.mxu0 0.0
  %81 = vmatpush2.msra.mxu0 0.0
  %82 = vmatprep.subr.mxu0 0.0
  %83 = vmatpush2.msra.mxu0 0.0
  %84 = vmatprep.subr.mxu0 0.0
  %85 = vmatpush2.msra.mxu0 0.0
  %86 = vmatprep.subr.mxu0 0.0
  %87 = vmatpush2.msra.mxu0 0.0
  %88 = vmatprep.mubr.f32.mxu0 0.0
  %89 = vmatmul.mubr.f32.gmra.mxu0 %v22
  %v90 = vpop.f32.mrf.mxu0
  %v91 = vadd.f32 0.0, %v90
  %v92 = vpop.f32.mrf.mxu0
  %v93 = vadd.f32 0.0, %v92
  %94 = vdwg.mxu0
  %v97 = vcombine.low %v91, %v93
  %v99 = vunpack.c.l.s4 1983009808
  %v100 = vunpack.c.0.s8 %v99
  %v101 = vlaneseq
  %v102 = vshrl.u32 %v101, 7
  %v103 = vsub.s32 %v100, %v102
  %v104 = vrot.slane %v97, %v103
  %106 = vst [vmem:[%s2] sm:$0xf] %v104
  // Predicated region
  $region10: #{pca_layer_forward.1} parent=0 // pred_check
    _
  $region11: #{pca_layer_forward.1} parent=0 // pred_check_branch
    %108 = sbr.rel (0) target = $region13
  $region12: #{pca_layer_forward.1} parent=0 // pred_region
    _
  $region13: #{pca_layer_forward.1} parent=0 // pred_fallthru
    _
  // Predicated region
  $region14: #{pca_layer_forward.1} parent=0 // pred_check
    _
  $region15: #{pca_layer_forward.1} parent=0 // pred_check_branch
    %110 = sbr.rel (0) target = $region17
  $region16: #{pca_layer_forward.1} parent=0 // pred_region
    _
  $region17: #{pca_layer_forward.1} parent=0 // pred_fallthru
    _

</llo_original>
